<compile_context>
chip_gen: v5e
topology: v5e:2x2
jax: 0.10.0
libtpu: 0.0.40
codegen_flags: <defaults>
</compile_context>

<pallas_src>
import math

import jax
import jax.numpy as jnp
from jax import lax
from jax.experimental import pallas as pl
from jax.experimental.pallas import tpu as pltpu


_SUBLANE = {4: 8, 2: 16, 1: 32}            # itemsize -> native sublane multiple
_VMEM_LIMIT_BYTES = 32 * 1024 * 1024       # scoped VMEM we ask the compiler for
_RESIDENT_TABLE_BUDGET = 12 * 1024 * 1024  # 2*table + 2*out-tile must fit this
_MAX_IDS_PER_CALL = 64 * 1024              # caps the SMEM id buffer (~256 KiB)


def _round_up(x, m):
    return ((x + m - 1) // m) * m


def _choose_tb(n_tokens, row_bytes, sublane, max_rows=1024):
    """Adaptive token-tile size.

    ~2 MiB of output per grid step, sublane aligned, >= ~4 grid steps when
    there is enough work (v7x megacore), and preferring a divisor of n_tokens
    so no padded tail / post-kernel slice copy is needed.
    """
    tb = max(sublane, min(max_rows, (2 << 20) // max(row_bytes, 1)))
    tb -= tb % sublane
    quarter = _round_up(max(-(-n_tokens // 4), sublane), sublane)
    tb = max(sublane, min(tb, quarter))
    if n_tokens % tb != 0:
        for cand in range(tb, max(sublane, tb // 2) - 1, -sublane):
            if n_tokens % cand == 0:
                tb = cand
                break
    return tb


def _embed_gather_kernel(ids_ref, table_ref, out_ref, copy_sem):
    """Gather `tb` embedding rows into the output tile via DMA.

    ids_ref:   SMEM int32 [n_pad]   all (padded) flattened token ids of this call
    table_ref: [V, Dw] embedding table; either a raw HBM ref (big vocab) or a
               VMEM-resident block (small vocab; fetched from HBM only once)
    out_ref:   VMEM [tb, Dw]        output tile for this grid step
    copy_sem:  scalar DMA semaphore shared by every row copy of this tile
    """
    vocab = table_ref.shape[0]
    tb = out_ref.shape[0]
    base = pl.program_id(0) * tb

    def issue_one(t):
        # Clamp defensively: nn.Embedding raises on out-of-range ids; we must
        # never form an out-of-range row address.
        row = jnp.clip(ids_ref[base + t], 0, vocab - 1)
        pltpu.make_async_copy(
            table_ref.at[pl.ds(row, 1)],   # (1, Dw) table row
            out_ref.at[pl.ds(t, 1)],       # (1, Dw) row of the output tile
            copy_sem,
        ).start()

    # Issue every row copy before waiting on any of them.  Statically unrolled
    # x8 so descriptor pushes overlap the next row's id read / address math.
    unroll = 8 if tb % 8 == 0 else 1

    def issue_group(g, carry):
        for u in range(unroll):            # static Python unroll
            issue_one(g * unroll + u)
        return carry

    lax.fori_loop(0, tb // unroll, issue_group, 0)

    # Single aggregate wait: every row copy signals the same DMA semaphore and
    # waits are byte-counted, so `tb` (1, Dw) copies == one (tb, Dw) descriptor.
    if vocab >= tb:   # static; always true except tiny-vocab + large-tile corner
        pltpu.make_async_copy(
            table_ref.at[pl.ds(0, tb)], out_ref, copy_sem
        ).wait()
    else:             # rare fallback: tb row-sized waits (no id re-reads / clamps)
        @pl.loop(0, tb)
        def _(t):
            pltpu.make_async_copy(
                table_ref.at[pl.ds(0, 1)], out_ref.at[pl.ds(0, 1)], copy_sem
            ).wait()


def token_embedding(ids, table):
    """ids: int[...] token ids; table: [V, D] -> ids.shape + (D,), table dtype."""
    V, D = table.shape
    lead_shape = ids.shape
    N = int(math.prod(lead_shape))
    ids_flat = jnp.reshape(ids, (N,)).astype(jnp.int32)

    # Pack sub-32-bit rows into uint32 so each row DMA writes whole 32-bit
    # sublanes of the output tile (sublane-dense stores, ~2x for bf16).
    itemsize = table.dtype.itemsize
    pack = (4 // itemsize) if itemsize < 4 else 1
    if pack > 1 and D % pack == 0:
        work_table = lax.bitcast_convert_type(
            table.reshape(V, D // pack, pack), jnp.uint32
        )
    else:
        pack = 1
        work_table = table
    Dw = work_table.shape[1]
    w_item = work_table.dtype.itemsize
    sublane = _SUBLANE.get(w_item, 8)
    row_bytes = Dw * w_item

    tb = _choose_tb(min(N, _MAX_IDS_PER_CALL), row_bytes, sublane)
    tile_bytes = tb * row_bytes
    table_bytes = V * Dw * w_item
    # Keep the table VMEM-resident when it (double-buffered) + the output
    # tiles fit comfortably inside the scoped VMEM limit on every generation.
    table_resident = (2 * table_bytes + 2 * tile_bytes) <= _RESIDENT_TABLE_BUDGET
    chunk = max(tb, (_MAX_IDS_PER_CALL // tb) * tb)

    def one_call(ids_chunk):
        (n,) = ids_chunk.shape
        n_pad = _round_up(n, tb)
        if n_pad != n:
            # Padded slots gather row 0 and are sliced off below.
            ids_chunk = jnp.pad(ids_chunk, (0, n_pad - n))
        if table_resident:
            table_spec = pl.BlockSpec((V, Dw), lambda i, ids: (0, 0))  # fetched once
        else:
            table_spec = pl.BlockSpec(memory_space=pl.ANY)             # stays in HBM
        out = pl.pallas_call(
            _embed_gather_kernel,
            out_shape=jax.ShapeDtypeStruct((n_pad, Dw), work_table.dtype),
            grid_spec=pltpu.PrefetchScalarGridSpec(
                num_scalar_prefetch=1,                       # ids -> SMEM
                grid=(n_pad // tb,),
                in_specs=[table_spec],
                out_specs=pl.BlockSpec((tb, Dw), lambda i, ids: (i, 0)),
                scratch_shapes=[pltpu.SemaphoreType.DMA(())],
            ),
            compiler_params=pltpu.CompilerParams(
                dimension_semantics=("parallel",),           # megacore split on v7x
                vmem_limit_bytes=_VMEM_LIMIT_BYTES,
            ),
        )(ids_chunk, work_table)
        return out if n_pad == n else out[:n]

    if N <= chunk:
        out_flat = one_call(ids_flat)
    else:
        # TODO(synk): the concatenate costs one extra HBM pass for extremely
        # long (>64K-token) streams; kept so the per-call SMEM id buffer stays
        # small instead of hitting the SMEM size cliff.
        out_flat = jnp.concatenate(
            [one_call(ids_flat[s:s + chunk]) for s in range(0, N, chunk)], axis=0
        )

    if pack > 1:
        out_flat = lax.bitcast_convert_type(out_flat, table.dtype)
        out_flat = out_flat.reshape(out_flat.shape[0], D)

    return out_flat.reshape(lead_shape + (D,))


if __name__ == "__main__":
    vocab_size = 64
    d_model = 128
    B, S = 2, 8

    key = jax.random.PRNGKey(0)
    k_tab, k_ids, k_tab2 = jax.random.split(key, 3)

    # nn.Embedding default init: weight ~ N(0, 1)
    embed_table = jax.random.normal(k_tab, (vocab_size, d_model), dtype=jnp.float32)
    token_ids = jax.random.randint(k_ids, (B, S), 0, vocab_size, dtype=jnp.int32)

    out = jax.block_until_ready(token_embedding(token_ids, embed_table))
    ref = jnp.take(embed_table, token_ids, axis=0)
    assert out.shape == (B, S, d_model)
    assert jnp.allclose(out, ref, atol=1e-6), "f32 mismatch vs reference gather"

    # Padded-tail case (N not a multiple of the tile).
    token_ids_odd = jax.random.randint(k_ids, (1, 5), 0, vocab_size, dtype=jnp.int32)
    out_odd = jax.block_until_ready(token_embedding(token_ids_odd, embed_table))
    ref_odd = jnp.take(embed_table, token_ids_odd, axis=0)
    assert jnp.allclose(out_odd, ref_odd, atol=1e-6), "padded-tail mismatch"

    # bf16 table exercises the uint32 row-packing path.
    embed_table_bf16 = jax.random.normal(
        k_tab2, (vocab_size, d_model), dtype=jnp.bfloat16
    )
    out_bf16 = jax.block_until_ready(token_embedding(token_ids, embed_table_bf16))
    ref_bf16 = jnp.take(embed_table_bf16, token_ids, axis=0)
    assert out_bf16.dtype == jnp.bfloat16
    assert jnp.array_equal(out_bf16, ref_bf16), "bf16 mismatch vs reference gather"

    print("KERNEL_OK")
</pallas_src>

<mosaic_0001>
module attributes {stable_mosaic.version = 11 : i64} {
  func.func @_embed_gather_kernel(%arg0: i32, %arg1: memref<16xi32, #tpu.memory_space<smem>>, %arg2: memref<64x128xf32, #tpu.memory_space<vmem>>, %arg3: memref<8x128xf32, #tpu.memory_space<vmem>>, %arg4: memref<!tpu.dma_semaphore, #tpu.memory_space<semaphore_mem>>) attributes {dimension_semantics = [#tpu.dimension_semantics<parallel>], iteration_bounds = array<i64: 2>, scalar_prefetch = 1 : i64, scratch_operands = 1 : i64, tpu.core_type = #tpu.core_type<tc>, window_params = [{pipeline_mode = #tpu.pipeline_mode<synchronous>, transform_indices = @transform_0, window_bounds = array<i64: 64, 128>}, {transform_indices = @transform_1, window_bounds = array<i64: 8, 128>}]} {
    %c8_i32 = arith.constant 8 : i32
    %0 = arith.muli %arg0, %c8_i32 : i32
    %c0_i32 = arith.constant 0 : i32
    %c8_i32_0 = arith.constant 8 : i32
    %1 = arith.muli %c0_i32, %c8_i32_0 : i32
    %c0_i32_1 = arith.constant 0 : i32
    %2 = arith.addi %1, %c0_i32_1 : i32
    %3 = arith.addi %0, %2 : i32
    %4 = arith.index_cast %3 : i32 to index
    %5 = memref.load %arg1[%4] : memref<16xi32, #tpu.memory_space<smem>>
    %c0_i32_2 = arith.constant 0 : i32
    %c63_i32 = arith.constant 63 : i32
    %6 = arith.maxsi %c0_i32_2, %5 : i32
    %7 = arith.minsi %c63_i32, %6 : i32
    %c0_i32_3 = arith.constant 0 : i32
    %8 = tpu.memref_slice %arg2[%7, %c0_i32_3] : memref<64x128xf32, #tpu.memory_space<vmem>> -> memref<1x128xf32, #tpu.memory_space<vmem>>
    %c0_i32_4 = arith.constant 0 : i32
    %9 = tpu.memref_slice %arg3[%2, %c0_i32_4] : memref<8x128xf32, #tpu.memory_space<vmem>> -> memref<1x128xf32, #tpu.memory_space<vmem>>
    tpu.enqueue_dma source(%8 : memref<1x128xf32, #tpu.memory_space<vmem>>) target(%9 : memref<1x128xf32, #tpu.memory_space<vmem>>) target_semaphore(%arg4 : memref<!tpu.dma_semaphore, #tpu.memory_space<semaphore_mem>>)
    %c8_i32_5 = arith.constant 8 : i32
    %10 = arith.muli %c0_i32, %c8_i32_5 : i32
    %c1_i32 = arith.constant 1 : i32
    %11 = arith.addi %10, %c1_i32 : i32
    %12 = arith.addi %0, %11 : i32
    %13 = arith.index_cast %12 : i32 to index
    %14 = memref.load %arg1[%13] : memref<16xi32, #tpu.memory_space<smem>>
    %c0_i32_6 = arith.constant 0 : i32
    %c63_i32_7 = arith.constant 63 : i32
    %15 = arith.maxsi %c0_i32_6, %14 : i32
    %16 = arith.minsi %c63_i32_7, %15 : i32
    %c0_i32_8 = arith.constant 0 : i32
    %17 = tpu.memref_slice %arg2[%16, %c0_i32_8] : memref<64x128xf32, #tpu.memory_space<vmem>> -> memref<1x128xf32, #tpu.memory_space<vmem>>
    %c0_i32_9 = arith.constant 0 : i32
    %18 = tpu.memref_slice %arg3[%11, %c0_i32_9] : memref<8x128xf32, #tpu.memory_space<vmem>> -> memref<1x128xf32, #tpu.memory_space<vmem>>
    tpu.enqueue_dma source(%17 : memref<1x128xf32, #tpu.memory_space<vmem>>) target(%18 : memref<1x128xf32, #tpu.memory_space<vmem>>) target_semaphore(%arg4 : memref<!tpu.dma_semaphore, #tpu.memory_space<semaphore_mem>>)
    %c8_i32_10 = arith.constant 8 : i32
    %19 = arith.muli %c0_i32, %c8_i32_10 : i32
    %c2_i32 = arith.constant 2 : i32
    %20 = arith.addi %19, %c2_i32 : i32
    %21 = arith.addi %0, %20 : i32
    %22 = arith.index_cast %21 : i32 to index
    %23 = memref.load %arg1[%22] : memref<16xi32, #tpu.memory_space<smem>>
    %c0_i32_11 = arith.constant 0 : i32
    %c63_i32_12 = arith.constant 63 : i32
    %24 = arith.maxsi %c0_i32_11, %23 : i32
    %25 = arith.minsi %c63_i32_12, %24 : i32
    %c0_i32_13 = arith.constant 0 : i32
    %26 = tpu.memref_slice %arg2[%25, %c0_i32_13] : memref<64x128xf32, #tpu.memory_space<vmem>> -> memref<1x128xf32, #tpu.memory_space<vmem>>
    %c0_i32_14 = arith.constant 0 : i32
    %27 = tpu.memref_slice %arg3[%20, %c0_i32_14] : memref<8x128xf32, #tpu.memory_space<vmem>> -> memref<1x128xf32, #tpu.memory_space<vmem>>
    tpu.enqueue_dma source(%26 : memref<1x128xf32, #tpu.memory_space<vmem>>) target(%27 : memref<1x128xf32, #tpu.memory_space<vmem>>) target_semaphore(%arg4 : memref<!tpu.dma_semaphore, #tpu.memory_space<semaphore_mem>>)
    %c8_i32_15 = arith.constant 8 : i32
    %28 = arith.muli %c0_i32, %c8_i32_15 : i32
    %c3_i32 = arith.constant 3 : i32
    %29 = arith.addi %28, %c3_i32 : i32
    %30 = arith.addi %0, %29 : i32
    %31 = arith.index_cast %30 : i32 to index
    %32 = memref.load %arg1[%31] : memref<16xi32, #tpu.memory_space<smem>>
    %c0_i32_16 = arith.constant 0 : i32
    %c63_i32_17 = arith.constant 63 : i32
    %33 = arith.maxsi %c0_i32_16, %32 : i32
    %34 = arith.minsi %c63_i32_17, %33 : i32
    %c0_i32_18 = arith.constant 0 : i32
    %35 = tpu.memref_slice %arg2[%34, %c0_i32_18] : memref<64x128xf32, #tpu.memory_space<vmem>> -> memref<1x128xf32, #tpu.memory_space<vmem>>
    %c0_i32_19 = arith.constant 0 : i32
    %36 = tpu.memref_slice %arg3[%29, %c0_i32_19] : memref<8x128xf32, #tpu.memory_space<vmem>> -> memref<1x128xf32, #tpu.memory_space<vmem>>
    tpu.enqueue_dma source(%35 : memref<1x128xf32, #tpu.memory_space<vmem>>) target(%36 : memref<1x128xf32, #tpu.memory_space<vmem>>) target_semaphore(%arg4 : memref<!tpu.dma_semaphore, #tpu.memory_space<semaphore_mem>>)
    %c8_i32_20 = arith.constant 8 : i32
    %37 = arith.muli %c0_i32, %c8_i32_20 : i32
    %c4_i32 = arith.constant 4 : i32
    %38 = arith.addi %37, %c4_i32 : i32
    %39 = arith.addi %0, %38 : i32
    %40 = arith.index_cast %39 : i32 to index
    %41 = memref.load %arg1[%40] : memref<16xi32, #tpu.memory_space<smem>>
    %c0_i32_21 = arith.constant 0 : i32
    %c63_i32_22 = arith.constant 63 : i32
    %42 = arith.maxsi %c0_i32_21, %41 : i32
    %43 = arith.minsi %c63_i32_22, %42 : i32
    %c0_i32_23 = arith.constant 0 : i32
    %44 = tpu.memref_slice %arg2[%43, %c0_i32_23] : memref<64x128xf32, #tpu.memory_space<vmem>> -> memref<1x128xf32, #tpu.memory_space<vmem>>
    %c0_i32_24 = arith.constant 0 : i32
    %45 = tpu.memref_slice %arg3[%38, %c0_i32_24] : memref<8x128xf32, #tpu.memory_space<vmem>> -> memref<1x128xf32, #tpu.memory_space<vmem>>
    tpu.enqueue_dma source(%44 : memref<1x128xf32, #tpu.memory_space<vmem>>) target(%45 : memref<1x128xf32, #tpu.memory_space<vmem>>) target_semaphore(%arg4 : memref<!tpu.dma_semaphore, #tpu.memory_space<semaphore_mem>>)
    %c8_i32_25 = arith.constant 8 : i32
    %46 = arith.muli %c0_i32, %c8_i32_25 : i32
    %c5_i32 = arith.constant 5 : i32
    %47 = arith.addi %46, %c5_i32 : i32
    %48 = arith.addi %0, %47 : i32
    %49 = arith.index_cast %48 : i32 to index
    %50 = memref.load %arg1[%49] : memref<16xi32, #tpu.memory_space<smem>>
    %c0_i32_26 = arith.constant 0 : i32
    %c63_i32_27 = arith.constant 63 : i32
    %51 = arith.maxsi %c0_i32_26, %50 : i32
    %52 = arith.minsi %c63_i32_27, %51 : i32
    %c0_i32_28 = arith.constant 0 : i32
    %53 = tpu.memref_slice %arg2[%52, %c0_i32_28] : memref<64x128xf32, #tpu.memory_space<vmem>> -> memref<1x128xf32, #tpu.memory_space<vmem>>
    %c0_i32_29 = arith.constant 0 : i32
    %54 = tpu.memref_slice %arg3[%47, %c0_i32_29] : memref<8x128xf32, #tpu.memory_space<vmem>> -> memref<1x128xf32, #tpu.memory_space<vmem>>
    tpu.enqueue_dma source(%53 : memref<1x128xf32, #tpu.memory_space<vmem>>) target(%54 : memref<1x128xf32, #tpu.memory_space<vmem>>) target_semaphore(%arg4 : memref<!tpu.dma_semaphore, #tpu.memory_space<semaphore_mem>>)
    %c8_i32_30 = arith.constant 8 : i32
    %55 = arith.muli %c0_i32, %c8_i32_30 : i32
    %c6_i32 = arith.constant 6 : i32
    %56 = arith.addi %55, %c6_i32 : i32
    %57 = arith.addi %0, %56 : i32
    %58 = arith.index_cast %57 : i32 to index
    %59 = memref.load %arg1[%58] : memref<16xi32, #tpu.memory_space<smem>>
    %c0_i32_31 = arith.constant 0 : i32
    %c63_i32_32 = arith.constant 63 : i32
    %60 = arith.maxsi %c0_i32_31, %59 : i32
    %61 = arith.minsi %c63_i32_32, %60 : i32
    %c0_i32_33 = arith.constant 0 : i32
    %62 = tpu.memref_slice %arg2[%61, %c0_i32_33] : memref<64x128xf32, #tpu.memory_space<vmem>> -> memref<1x128xf32, #tpu.memory_space<vmem>>
    %c0_i32_34 = arith.constant 0 : i32
    %63 = tpu.memref_slice %arg3[%56, %c0_i32_34] : memref<8x128xf32, #tpu.memory_space<vmem>> -> memref<1x128xf32, #tpu.memory_space<vmem>>
    tpu.enqueue_dma source(%62 : memref<1x128xf32, #tpu.memory_space<vmem>>) target(%63 : memref<1x128xf32, #tpu.memory_space<vmem>>) target_semaphore(%arg4 : memref<!tpu.dma_semaphore, #tpu.memory_space<semaphore_mem>>)
    %c8_i32_35 = arith.constant 8 : i32
    %64 = arith.muli %c0_i32, %c8_i32_35 : i32
    %c7_i32 = arith.constant 7 : i32
    %65 = arith.addi %64, %c7_i32 : i32
    %66 = arith.addi %0, %65 : i32
    %67 = arith.index_cast %66 : i32 to index
    %68 = memref.load %arg1[%67] : memref<16xi32, #tpu.memory_space<smem>>
    %c0_i32_36 = arith.constant 0 : i32
    %c63_i32_37 = arith.constant 63 : i32
    %69 = arith.maxsi %c0_i32_36, %68 : i32
    %70 = arith.minsi %c63_i32_37, %69 : i32
    %c0_i32_38 = arith.constant 0 : i32
    %71 = tpu.memref_slice %arg2[%70, %c0_i32_38] : memref<64x128xf32, #tpu.memory_space<vmem>> -> memref<1x128xf32, #tpu.memory_space<vmem>>
    %c0_i32_39 = arith.constant 0 : i32
    %72 = tpu.memref_slice %arg3[%65, %c0_i32_39] : memref<8x128xf32, #tpu.memory_space<vmem>> -> memref<1x128xf32, #tpu.memory_space<vmem>>
    tpu.enqueue_dma source(%71 : memref<1x128xf32, #tpu.memory_space<vmem>>) target(%72 : memref<1x128xf32, #tpu.memory_space<vmem>>) target_semaphore(%arg4 : memref<!tpu.dma_semaphore, #tpu.memory_space<semaphore_mem>>)
    %c1_i32_40 = arith.constant 1 : i32
    %c0_i32_41 = arith.constant 0 : i32
    %c0_i32_42 = arith.constant 0 : i32
    %73 = tpu.memref_slice %arg2[%c0_i32_41, %c0_i32_42] : memref<64x128xf32, #tpu.memory_space<vmem>> -> memref<8x128xf32, #tpu.memory_space<vmem>>
    tpu.wait_dma2 semaphore(%arg4 : memref<!tpu.dma_semaphore, #tpu.memory_space<semaphore_mem>>) src(%73 : memref<8x128xf32, #tpu.memory_space<vmem>>) dst(%arg3 : memref<8x128xf32, #tpu.memory_space<vmem>>)
    return
  }
  func.func @transform_0(%arg0: i32, %arg1: memref<16xi32, #tpu.memory_space<smem>>) -> (i32, i32) {
    %c0_i32 = arith.constant 0 : i32
    %c0_i32_0 = arith.constant 0 : i32
    %c0_i32_1 = arith.constant 0 : i32
    return %c0_i32, %c0_i32_0 : i32, i32
  }
  func.func @transform_1(%arg0: i32, %arg1: memref<16xi32, #tpu.memory_space<smem>>) -> (i32, i32) {
    %c0_i32 = arith.constant 0 : i32
    %c0_i32_0 = arith.constant 0 : i32
    return %arg0, %c0_i32 : i32, i32
  }
}

</mosaic_0001>

<llo_original>
// kernel: tpu_custom_call.1
$region0: #{tpu_custom_call.1}
  #allocation0 [shape = 'u32[]', space=smem, size = 0x4, offset = 0x4, fixed_abs, tag = 'smem constant byte address 0x4 - core index']
  #allocation1 [shape = 'u32[72,128]{1,0:T(1,128)}', space=vmem, size = 0x9000, scoped, tag = 'internal scratch']
  #allocation2 [shape = 's32[1]{0}', space=sflag, size = 0x4, scoped, tag = 'scratch operand']
  #allocation3 [shape = 's32[1]{0}', space=sflag, size = 0x4, scoped, tag = 'scoped memory for tpu_custom_call.1']
  #allocation4 [shape = 'u8[512]{0}', space=smem, size = 0x200, scoped, tag = 'prefetched SMEM operand 0']
  #allocation9 [shape = 's32[]', space=sflag, size = 0x4, offset = 0, fixed_abs, tag = 'sflag constant byte address 0x0 - dummy sync flag']
  #allocation10 [shape = 's32[]', space=sflag, size = 0x4, offset = 0, fixed_abs, tag = 'sflag constant byte address 0x0 - dummy sync flag']
  #allocation11 [shape = 's32[]', space=sflag, size = 0x4, offset = 0, fixed_abs, tag = 'sflag constant byte address 0x0 - dummy sync flag']
  #allocation12 [shape = 's32[]', space=sflag, size = 0x4, offset = 0, fixed_abs, tag = 'sflag constant byte address 0x0 - dummy sync flag']
  #allocation13 [shape = 's32[]', space=sflag, size = 0x4, offset = 0, fixed_abs, tag = 'sflag constant byte address 0x0 - dummy sync flag']
  #allocation14 [shape = 's32[]', space=sflag, size = 0x4, offset = 0, fixed_abs, tag = 'sflag constant byte address 0x0 - dummy sync flag']
  #allocation15 [shape = 's32[]', space=sflag, size = 0x4, offset = 0, fixed_abs, tag = 'sflag constant byte address 0x0 - dummy sync flag']
  #allocation16 [shape = 's32[]', space=sflag, size = 0x4, offset = 0, fixed_abs, tag = 'sflag constant byte address 0x0 - dummy sync flag']
  %s0 = inlined_call_operand.hbm [shape: s32[16], index: 0, kind: input, shape index: {}]
  %s1 = inlined_call_operand.hbm [shape: f32[64,128], index: 1, kind: input, shape index: {}]
  %s2 = inlined_call_operand.hbm [shape: f32[16,128], index: 2, kind: output, shape index: {}]
  %s3 = sld [smem:[#allocation0]]
  $region281: #{tpu_custom_call.1} parent=0
    _
  %s5 = ssub.s32 1, %s3
  %s6 = scalar_select 0, %s5, %s3
  %s8 = sshll.u32 %s0, 4
  %s9 = int_to_ptr.hbm [resolvable:$true] %s8
  %11 = dma.hbm_to_smem %s9, 16, [#allocation4], [#allocation3]
  %13 = dma.done [#allocation3], 16
  %14 = sfence
  $region1: #{tpu_custom_call.1} parent=0
    #allocation5 [shape = 'u8[32768]{0}', space=vmem, size = 0x8000, scoped, tag = 'input window, operand 1, single buffered']
    #allocation6 [shape = 's32[2]{0}', space=sflag, size = 0x8, scoped, tag = 'scoped memory for tpu_custom_call.1']
    #allocation7 [shape = 's32[2]{0}', space=sflag, size = 0x8, scoped, tag = 'scoped memory for tpu_custom_call.1']
    #allocation8 [shape = 'u8[8192]{0}', space=vmem, size = 0x2000, scoped, tag = 'output window, operand 0']
    %15 = vsyncpa [#allocation6], 0
    %16 = vsyncpa [#allocation7], 0
    %s17 = scalar_lea.sflag [#allocation7], 1
    %18 = vsyncpa %s17, 0
    loop: start=0, step=1, limit=4
    $region2: #{tpu_custom_call.1} parent=1 // loop_pre_header
      _
    $region3: #{tpu_custom_call.1} parent=1 // loop_header
      %s20 = sphi 0, %s24
      %p21 = scmp.ge.s32.totalorder %s20, 4
      %s28 = sphi 0, %s28
      %s30 = sphi 0, %s28
      %s31 = sphi 0, %s30
      %s45 = sphi 0, %s31
      %s51 = sphi 0, %s53
      %s54 = sphi 0, %s51
      %s55 = sphi 0, %s54
      %s71 = sphi 0, %s55
    $region4: #{tpu_custom_call.1} parent=1 // loop_header_branch
      %23 = sbr.rel (%p21) target = $region8
    $region5: #{tpu_custom_call.1} parent=1 // loop_body
      %s25 = ssub.s32 %s20, 1
      %s26 = ssub.s32 %s20, 2
      %s27 = sadd.s32 %s20, 1
      %s29 = sadd.s32 %s28, 1
      %p32 = scmp.eq.s32.totalorder %s20, 1
      %p33 = scmp.ne.s32.totalorder %s28, %s30
      %p34 = scmp.eq.s32.totalorder %s20, 0
      %p35 = por %p33, %p34
      %p36 = scmp.ne.s32.totalorder %s28, %s30
      %p37 = scmp.eq.s32.totalorder %s25, 1
      %p38 = por %p36, %p37
      %p39 = scmp.ne.s32.totalorder %s30, %s31
      %p40 = scmp.eq.s32.totalorder %s25, 0
      %p41 = por %p39, %p40
      %p42 = scmp.ne.s32.totalorder %s30, %s31
      %p43 = scmp.eq.s32.totalorder %s26, 1
      %p44 = por %p42, %p43
      %p46 = scmp.ne.s32.totalorder %s31, %s45
      %p47 = scmp.eq.s32.totalorder %s26, 0
      %p48 = por %p46, %p47
      %s49 = ssub.s32 %s20, %s27
      %p50 = scmp.eq.s32.totalorder %s49, 0
      %s52 = sadd.s32 %s51, 1
      %s53 = scalar_select %p50, %s51, %s52
      %p56 = pneg %p50
      %p57 = scmp.eq.s32.totalorder %s20, 1
      %p58 = por %p56, %p57
      %p59 = scmp.ne.s32.totalorder %s51, %s54
      %p60 = scmp.eq.s32.totalorder %s20, 0
      %p61 = por %p59, %p60
      %p62 = scmp.ne.s32.totalorder %s51, %s54
      %p63 = scmp.eq.s32.totalorder %s25, 1
      %p64 = por %p62, %p63
      %p65 = scmp.ne.s32.totalorder %s54, %s55
      %p66 = scmp.eq.s32.totalorder %s25, 0
      %p67 = por %p65, %p66
      %p68 = scmp.ne.s32.totalorder %s54, %s55
      %p69 = scmp.eq.s32.totalorder %s26, 1
      %p70 = por %p68, %p69
      %p72 = scmp.ne.s32.totalorder %s55, %s71
      %p73 = scmp.eq.s32.totalorder %s26, 0
      %p74 = por %p72, %p73
      %p75 = scmp.le.s32.totalorder 1, %s20
      %p76 = scmp.lt.s32.totalorder %s20, 3
      %p77 = pnand %p75, %p76
      %p78 = pneg %p77
      // Predicated region
      $region9: #{tpu_custom_call.1} parent=5 // pred_check
        _
      $region10: #{tpu_custom_call.1} parent=5 // pred_check_branch
        %80 = sbr.rel (%p77) target = $region12
      $region11: #{tpu_custom_call.1} parent=5 // pred_region
        %s81 = ssub.s32 %s20, 1
        // Predicated region
        $region13: #{tpu_custom_call.1} parent=11 // pred_check
          %p82 = pneg %p41
        $region14: #{tpu_custom_call.1} parent=11 // pred_check_branch
          %84 = sbr.rel (%p82) target = $region16
        $region15: #{tpu_custom_call.1} parent=11 // pred_region
          %86 = vsyncadd [#allocation6], 0
          %s87 = sshll.u32 %s1, 4
          %s88 = int_to_ptr.hbm [resolvable:$true] %s87
          %s89 = sshll.u32 [#allocation5], 4
          %s90 = int_to_ptr.vmem [resolvable:$true] %s89
          %95 = dma.hbm_to_vmem [thread:$0]  %s88, 1024, %s90, [#allocation6], 128, 128, 8
        $region16: #{tpu_custom_call.1} parent=11 // pred_fallthru
          _
      $region12: #{tpu_custom_call.1} parent=5 // pred_fallthru
        _
      %p96 = scmp.lt.s32.totalorder %s20, 2
      // Predicated region
      $region17: #{tpu_custom_call.1} parent=5 // pred_check
        %p97 = pneg %p96
      $region18: #{tpu_custom_call.1} parent=5 // pred_check_branch
        %99 = sbr.rel (%p97) target = $region20
      $region19: #{tpu_custom_call.1} parent=5 // pred_region
        _
      $region20: #{tpu_custom_call.1} parent=5 // pred_fallthru
        _
      %p100 = scmp.le.s32.totalorder 1, %s20
      %p101 = scmp.lt.s32.totalorder %s20, 3
      %p102 = pnand %p100, %p101
      %p103 = pneg %p102
      // Predicated region
      $region21: #{tpu_custom_call.1} parent=5 // pred_check
        _
      $region22: #{tpu_custom_call.1} parent=5 // pred_check_branch
        %105 = sbr.rel (%p102) target = $region24
      $region23: #{tpu_custom_call.1} parent=5 // pred_region
        %s106 = ssub.s32 %s20, 1
        // Predicated region
        $region25: #{tpu_custom_call.1} parent=23 // pred_check
          %p107 = pneg %p41
        $region26: #{tpu_custom_call.1} parent=23 // pred_check_branch
          %109 = sbr.rel (%p107) target = $region28
        $region27: #{tpu_custom_call.1} parent=23 // pred_region
          %111 = dma.done [#allocation6], 1024
        $region28: #{tpu_custom_call.1} parent=23 // pred_fallthru
          _
        %p112 = pneg %p41
        %p113 = pneg %p38
        %p114 = pneg %p67
        %p115 = pneg %p64
        %s116 = sand.u32 %s54, 1
        %s117 = scalar_lea.sflag [#allocation7], %s116
        %s118 = sand.u32 %s54, 1
        %s119 = smul.addr %s118, 8
        %s120 = scalar_lea.vmem [#allocation8], %s119
        %s121 = smul.u32 %s25, 8
        %s122 = sld [smem:[#allocation4 + %s121]]
        %p123 = scmp.gt.s32.totalorder %s122, 0
        %s124 = scalar_select %p123, %s122, 0
        %p125 = scmp.lt.s32.totalorder %s124, 63
        %s126 = scalar_select %p125, %s124, 63
        %s127 = scalar_lea.vmem [#allocation5], %s126
        // Predicated region
        $region29: #{tpu_custom_call.1} parent=23 // pred_check
          _
        $region30: #{tpu_custom_call.1} parent=23 // pred_check_branch
          %129 = sbr.rel target = $region32
        $region31: #{tpu_custom_call.1} parent=23 // pred_region
          // Predicated region
          $region44: #{tpu_custom_call.1} parent=31 // pred_check
            _
          $region45: #{tpu_custom_call.1} parent=31 // pred_check_branch
            %145 = sbr.rel (0) target = $region47
          $region46: #{tpu_custom_call.1} parent=31 // pred_region
            %s147 = ssub.s32 2, 1
            loop: start=0, step=1, limit=1
            $region48: #{tpu_custom_call.1} parent=46 // loop_pre_header
              _
            $region49: #{tpu_custom_call.1} parent=46 // loop_header
              %s149 = sphi 0, %s153
              %p150 = scmp.ge.s32.totalorder %s149, 1
              %s154 = sphi %s127, %s127
              %s155 = sphi %s120, %s120
            $region50: #{tpu_custom_call.1} parent=46 // loop_header_branch
              %152 = sbr.rel (%p150) target = $region54
            $region51: #{tpu_custom_call.1} parent=46 // loop_body
              %v156 = vld [vmem:[%s154] sm:%s147]
              %157 = vst [vmem:[%s155] sm:%s147] %v156
            $region52: #{tpu_custom_call.1} parent=46 // loop_footer
              %s153 = sadd.s32 1, %s149
            $region53: #{tpu_custom_call.1} parent=46 // loop_footer_branch
              %148 = sbr.rel target = $region49
            $region54: #{tpu_custom_call.1} parent=46 // loop_exit
              _
          $region47: #{tpu_custom_call.1} parent=31 // pred_fallthru
            _
        $region32: #{tpu_custom_call.1} parent=23 // pred_fallthru
          _
        // Predicated region
        $region33: #{tpu_custom_call.1} parent=23 // pred_check
          _
        $region34: #{tpu_custom_call.1} parent=23 // pred_check_branch
          %131 = sbr.rel (0) target = $region36
        $region35: #{tpu_custom_call.1} parent=23 // pred_region
          %s133 = ssub.s32 2, 1
          loop: start=0, step=1, limit=1
          $region37: #{tpu_custom_call.1} parent=35 // loop_pre_header
            _
          $region38: #{tpu_custom_call.1} parent=35 // loop_header
            %s135 = sphi 0, %s139
            %p136 = scmp.ge.s32.totalorder %s135, 1
            %s140 = sphi %s127, %s127
            %s141 = sphi %s120, %s120
          $region39: #{tpu_custom_call.1} parent=35 // loop_header_branch
            %138 = sbr.rel (%p136) target = $region43
          $region40: #{tpu_custom_call.1} parent=35 // loop_body
            %v142 = vld [vmem:[%s140] sm:%s133]
            %143 = vst [vmem:[%s141] sm:%s133] %v142
          $region41: #{tpu_custom_call.1} parent=35 // loop_footer
            %s139 = sadd.s32 1, %s135
          $region42: #{tpu_custom_call.1} parent=35 // loop_footer_branch
            %134 = sbr.rel target = $region38
          $region43: #{tpu_custom_call.1} parent=35 // loop_exit
            _
        $region36: #{tpu_custom_call.1} parent=23 // pred_fallthru
          _
        // Predicated region
        $region55: #{tpu_custom_call.1} parent=23 // pred_check
          _
        $region56: #{tpu_custom_call.1} parent=23 // pred_check_branch
          %160 = sbr.rel (0) target = $region58
        $region57: #{tpu_custom_call.1} parent=23 // pred_region
          %161 = vsyncadd [#allocation2], 16
        $region58: #{tpu_custom_call.1} parent=23 // pred_fallthru
          _
        %s162 = sadd.s32 %s121, 1
        %s163 = sld [smem:[#allocation4 + %s162]]
        %p164 = scmp.gt.s32.totalorder %s163, 0
        %s165 = scalar_select %p164, %s163, 0
        %p166 = scmp.lt.s32.totalorder %s165, 63
        %s167 = scalar_select %p166, %s165, 63
        %s168 = scalar_lea.vmem [#allocation5], %s167
        %s169 = scalar_lea.vmem %s120, 1 [#allocation8]
        // Predicated region
        $region59: #{tpu_custom_call.1} parent=23 // pred_check
          _
        $region60: #{tpu_custom_call.1} parent=23 // pred_check_branch
          %171 = sbr.rel target = $region62
        $region61: #{tpu_custom_call.1} parent=23 // pred_region
          // Predicated region
          $region74: #{tpu_custom_call.1} parent=61 // pred_check
            _
          $region75: #{tpu_custom_call.1} parent=61 // pred_check_branch
            %187 = sbr.rel (0) target = $region77
          $region76: #{tpu_custom_call.1} parent=61 // pred_region
            %s189 = ssub.s32 2, 1
            loop: start=0, step=1, limit=1
            $region78: #{tpu_custom_call.1} parent=76 // loop_pre_header
              _
            $region79: #{tpu_custom_call.1} parent=76 // loop_header
              %s191 = sphi 0, %s195
              %p192 = scmp.ge.s32.totalorder %s191, 1
              %s196 = sphi %s168, %s168
              %s197 = sphi %s169, %s169
            $region80: #{tpu_custom_call.1} parent=76 // loop_header_branch
              %194 = sbr.rel (%p192) target = $region84
            $region81: #{tpu_custom_call.1} parent=76 // loop_body
              %v198 = vld [vmem:[%s196] sm:%s189]
              %199 = vst [vmem:[%s197] sm:%s189] %v198
            $region82: #{tpu_custom_call.1} parent=76 // loop_footer
              %s195 = sadd.s32 1, %s191
            $region83: #{tpu_custom_call.1} parent=76 // loop_footer_branch
              %190 = sbr.rel target = $region79
            $region84: #{tpu_custom_call.1} parent=76 // loop_exit
              _
          $region77: #{tpu_custom_call.1} parent=61 // pred_fallthru
            _
        $region62: #{tpu_custom_call.1} parent=23 // pred_fallthru
          _
        // Predicated region
        $region63: #{tpu_custom_call.1} parent=23 // pred_check
          _
        $region64: #{tpu_custom_call.1} parent=23 // pred_check_branch
          %173 = sbr.rel (0) target = $region66
        $region65: #{tpu_custom_call.1} parent=23 // pred_region
          %s175 = ssub.s32 2, 1
          loop: start=0, step=1, limit=1
          $region67: #{tpu_custom_call.1} parent=65 // loop_pre_header
            _
          $region68: #{tpu_custom_call.1} parent=65 // loop_header
            %s177 = sphi 0, %s181
            %p178 = scmp.ge.s32.totalorder %s177, 1
            %s182 = sphi %s168, %s168
            %s183 = sphi %s169, %s169
          $region69: #{tpu_custom_call.1} parent=65 // loop_header_branch
            %180 = sbr.rel (%p178) target = $region73
          $region70: #{tpu_custom_call.1} parent=65 // loop_body
            %v184 = vld [vmem:[%s182] sm:%s175]
            %185 = vst [vmem:[%s183] sm:%s175] %v184
          $region71: #{tpu_custom_call.1} parent=65 // loop_footer
            %s181 = sadd.s32 1, %s177
          $region72: #{tpu_custom_call.1} parent=65 // loop_footer_branch
            %176 = sbr.rel target = $region68
          $region73: #{tpu_custom_call.1} parent=65 // loop_exit
            _
        $region66: #{tpu_custom_call.1} parent=23 // pred_fallthru
          _
        // Predicated region
        $region85: #{tpu_custom_call.1} parent=23 // pred_check
          _
        $region86: #{tpu_custom_call.1} parent=23 // pred_check_branch
          %202 = sbr.rel (0) target = $region88
        $region87: #{tpu_custom_call.1} parent=23 // pred_region
          %203 = vsyncadd [#allocation2], 16
        $region88: #{tpu_custom_call.1} parent=23 // pred_fallthru
          _
        %s204 = sadd.s32 %s121, 2
        %s205 = sld [smem:[#allocation4 + %s204]]
        %p206 = scmp.gt.s32.totalorder %s205, 0
        %s207 = scalar_select %p206, %s205, 0
        %p208 = scmp.lt.s32.totalorder %s207, 63
        %s209 = scalar_select %p208, %s207, 63
        %s210 = scalar_lea.vmem [#allocation5], %s209
        %s211 = scalar_lea.vmem %s120, 2 [#allocation8]
        // Predicated region
        $region89: #{tpu_custom_call.1} parent=23 // pred_check
          _
        $region90: #{tpu_custom_call.1} parent=23 // pred_check_branch
          %213 = sbr.rel target = $region92
        $region91: #{tpu_custom_call.1} parent=23 // pred_region
          // Predicated region
          $region104: #{tpu_custom_call.1} parent=91 // pred_check
            _
          $region105: #{tpu_custom_call.1} parent=91 // pred_check_branch
            %229 = sbr.rel (0) target = $region107
          $region106: #{tpu_custom_call.1} parent=91 // pred_region
            %s231 = ssub.s32 2, 1
            loop: start=0, step=1, limit=1
            $region108: #{tpu_custom_call.1} parent=106 // loop_pre_header
              _
            $region109: #{tpu_custom_call.1} parent=106 // loop_header
              %s233 = sphi 0, %s237
              %p234 = scmp.ge.s32.totalorder %s233, 1
              %s238 = sphi %s210, %s210
              %s239 = sphi %s211, %s211
            $region110: #{tpu_custom_call.1} parent=106 // loop_header_branch
              %236 = sbr.rel (%p234) target = $region114
            $region111: #{tpu_custom_call.1} parent=106 // loop_body
              %v240 = vld [vmem:[%s238] sm:%s231]
              %241 = vst [vmem:[%s239] sm:%s231] %v240
            $region112: #{tpu_custom_call.1} parent=106 // loop_footer
              %s237 = sadd.s32 1, %s233
            $region113: #{tpu_custom_call.1} parent=106 // loop_footer_branch
              %232 = sbr.rel target = $region109
            $region114: #{tpu_custom_call.1} parent=106 // loop_exit
              _
          $region107: #{tpu_custom_call.1} parent=91 // pred_fallthru
            _
        $region92: #{tpu_custom_call.1} parent=23 // pred_fallthru
          _
        // Predicated region
        $region93: #{tpu_custom_call.1} parent=23 // pred_check
          _
        $region94: #{tpu_custom_call.1} parent=23 // pred_check_branch
          %215 = sbr.rel (0) target = $region96
        $region95: #{tpu_custom_call.1} parent=23 // pred_region
          %s217 = ssub.s32 2, 1
          loop: start=0, step=1, limit=1
          $region97: #{tpu_custom_call.1} parent=95 // loop_pre_header
            _
          $region98: #{tpu_custom_call.1} parent=95 // loop_header
            %s219 = sphi 0, %s223
            %p220 = scmp.ge.s32.totalorder %s219, 1
            %s224 = sphi %s210, %s210
            %s225 = sphi %s211, %s211
          $region99: #{tpu_custom_call.1} parent=95 // loop_header_branch
            %222 = sbr.rel (%p220) target = $region103
          $region100: #{tpu_custom_call.1} parent=95 // loop_body
            %v226 = vld [vmem:[%s224] sm:%s217]
            %227 = vst [vmem:[%s225] sm:%s217] %v226
          $region101: #{tpu_custom_call.1} parent=95 // loop_footer
            %s223 = sadd.s32 1, %s219
          $region102: #{tpu_custom_call.1} parent=95 // loop_footer_branch
            %218 = sbr.rel target = $region98
          $region103: #{tpu_custom_call.1} parent=95 // loop_exit
            _
        $region96: #{tpu_custom_call.1} parent=23 // pred_fallthru
          _
        // Predicated region
        $region115: #{tpu_custom_call.1} parent=23 // pred_check
          _
        $region116: #{tpu_custom_call.1} parent=23 // pred_check_branch
          %244 = sbr.rel (0) target = $region118
        $region117: #{tpu_custom_call.1} parent=23 // pred_region
          %245 = vsyncadd [#allocation2], 16
        $region118: #{tpu_custom_call.1} parent=23 // pred_fallthru
          _
        %s246 = sadd.s32 %s121, 3
        %s247 = sld [smem:[#allocation4 + %s246]]
        %p248 = scmp.gt.s32.totalorder %s247, 0
        %s249 = scalar_select %p248, %s247, 0
        %p250 = scmp.lt.s32.totalorder %s249, 63
        %s251 = scalar_select %p250, %s249, 63
        %s252 = scalar_lea.vmem [#allocation5], %s251
        %s253 = scalar_lea.vmem %s120, 3 [#allocation8]
        // Predicated region
        $region119: #{tpu_custom_call.1} parent=23 // pred_check
          _
        $region120: #{tpu_custom_call.1} parent=23 // pred_check_branch
          %255 = sbr.rel target = $region122
        $region121: #{tpu_custom_call.1} parent=23 // pred_region
          // Predicated region
          $region134: #{tpu_custom_call.1} parent=121 // pred_check
            _
          $region135: #{tpu_custom_call.1} parent=121 // pred_check_branch
            %271 = sbr.rel (0) target = $region137
          $region136: #{tpu_custom_call.1} parent=121 // pred_region
            %s273 = ssub.s32 2, 1
            loop: start=0, step=1, limit=1
            $region138: #{tpu_custom_call.1} parent=136 // loop_pre_header
              _
            $region139: #{tpu_custom_call.1} parent=136 // loop_header
              %s275 = sphi 0, %s279
              %p276 = scmp.ge.s32.totalorder %s275, 1
              %s280 = sphi %s252, %s252
              %s281 = sphi %s253, %s253
            $region140: #{tpu_custom_call.1} parent=136 // loop_header_branch
              %278 = sbr.rel (%p276) target = $region144
            $region141: #{tpu_custom_call.1} parent=136 // loop_body
              %v282 = vld [vmem:[%s280] sm:%s273]
              %283 = vst [vmem:[%s281] sm:%s273] %v282
            $region142: #{tpu_custom_call.1} parent=136 // loop_footer
              %s279 = sadd.s32 1, %s275
            $region143: #{tpu_custom_call.1} parent=136 // loop_footer_branch
              %274 = sbr.rel target = $region139
            $region144: #{tpu_custom_call.1} parent=136 // loop_exit
              _
          $region137: #{tpu_custom_call.1} parent=121 // pred_fallthru
            _
        $region122: #{tpu_custom_call.1} parent=23 // pred_fallthru
          _
        // Predicated region
        $region123: #{tpu_custom_call.1} parent=23 // pred_check
          _
        $region124: #{tpu_custom_call.1} parent=23 // pred_check_branch
          %257 = sbr.rel (0) target = $region126
        $region125: #{tpu_custom_call.1} parent=23 // pred_region
          %s259 = ssub.s32 2, 1
          loop: start=0, step=1, limit=1
          $region127: #{tpu_custom_call.1} parent=125 // loop_pre_header
            _
          $region128: #{tpu_custom_call.1} parent=125 // loop_header
            %s261 = sphi 0, %s265
            %p262 = scmp.ge.s32.totalorder %s261, 1
            %s266 = sphi %s252, %s252
            %s267 = sphi %s253, %s253
          $region129: #{tpu_custom_call.1} parent=125 // loop_header_branch
            %264 = sbr.rel (%p262) target = $region133
          $region130: #{tpu_custom_call.1} parent=125 // loop_body
            %v268 = vld [vmem:[%s266] sm:%s259]
            %269 = vst [vmem:[%s267] sm:%s259] %v268
          $region131: #{tpu_custom_call.1} parent=125 // loop_footer
            %s265 = sadd.s32 1, %s261
          $region132: #{tpu_custom_call.1} parent=125 // loop_footer_branch
            %260 = sbr.rel target = $region128
          $region133: #{tpu_custom_call.1} parent=125 // loop_exit
            _
        $region126: #{tpu_custom_call.1} parent=23 // pred_fallthru
          _
        // Predicated region
        $region145: #{tpu_custom_call.1} parent=23 // pred_check
          _
        $region146: #{tpu_custom_call.1} parent=23 // pred_check_branch
          %286 = sbr.rel (0) target = $region148
        $region147: #{tpu_custom_call.1} parent=23 // pred_region
          %287 = vsyncadd [#allocation2], 16
        $region148: #{tpu_custom_call.1} parent=23 // pred_fallthru
          _
        %s288 = sadd.s32 %s121, 4
        %s289 = sld [smem:[#allocation4 + %s288]]
        %p290 = scmp.gt.s32.totalorder %s289, 0
        %s291 = scalar_select %p290, %s289, 0
        %p292 = scmp.lt.s32.totalorder %s291, 63
        %s293 = scalar_select %p292, %s291, 63
        %s294 = scalar_lea.vmem [#allocation5], %s293
        %s295 = scalar_lea.vmem %s120, 4 [#allocation8]
        // Predicated region
        $region149: #{tpu_custom_call.1} parent=23 // pred_check
          _
        $region150: #{tpu_custom_call.1} parent=23 // pred_check_branch
          %297 = sbr.rel target = $region152
        $region151: #{tpu_custom_call.1} parent=23 // pred_region
          // Predicated region
          $region164: #{tpu_custom_call.1} parent=151 // pred_check
            _
          $region165: #{tpu_custom_call.1} parent=151 // pred_check_branch
            %313 = sbr.rel (0) target = $region167
          $region166: #{tpu_custom_call.1} parent=151 // pred_region
            %s315 = ssub.s32 2, 1
            loop: start=0, step=1, limit=1
            $region168: #{tpu_custom_call.1} parent=166 // loop_pre_header
              _
            $region169: #{tpu_custom_call.1} parent=166 // loop_header
              %s317 = sphi 0, %s321
              %p318 = scmp.ge.s32.totalorder %s317, 1
              %s322 = sphi %s294, %s294
              %s323 = sphi %s295, %s295
            $region170: #{tpu_custom_call.1} parent=166 // loop_header_branch
              %320 = sbr.rel (%p318) target = $region174
            $region171: #{tpu_custom_call.1} parent=166 // loop_body
              %v324 = vld [vmem:[%s322] sm:%s315]
              %325 = vst [vmem:[%s323] sm:%s315] %v324
            $region172: #{tpu_custom_call.1} parent=166 // loop_footer
              %s321 = sadd.s32 1, %s317
            $region173: #{tpu_custom_call.1} parent=166 // loop_footer_branch
              %316 = sbr.rel target = $region169
            $region174: #{tpu_custom_call.1} parent=166 // loop_exit
              _
          $region167: #{tpu_custom_call.1} parent=151 // pred_fallthru
            _
        $region152: #{tpu_custom_call.1} parent=23 // pred_fallthru
          _
        // Predicated region
        $region153: #{tpu_custom_call.1} parent=23 // pred_check
          _
        $region154: #{tpu_custom_call.1} parent=23 // pred_check_branch
          %299 = sbr.rel (0) target = $region156
        $region155: #{tpu_custom_call.1} parent=23 // pred_region
          %s301 = ssub.s32 2, 1
          loop: start=0, step=1, limit=1
          $region157: #{tpu_custom_call.1} parent=155 // loop_pre_header
            _
          $region158: #{tpu_custom_call.1} parent=155 // loop_header
            %s303 = sphi 0, %s307
            %p304 = scmp.ge.s32.totalorder %s303, 1
            %s308 = sphi %s294, %s294
            %s309 = sphi %s295, %s295
          $region159: #{tpu_custom_call.1} parent=155 // loop_header_branch
            %306 = sbr.rel (%p304) target = $region163
          $region160: #{tpu_custom_call.1} parent=155 // loop_body
            %v310 = vld [vmem:[%s308] sm:%s301]
            %311 = vst [vmem:[%s309] sm:%s301] %v310
          $region161: #{tpu_custom_call.1} parent=155 // loop_footer
            %s307 = sadd.s32 1, %s303
          $region162: #{tpu_custom_call.1} parent=155 // loop_footer_branch
            %302 = sbr.rel target = $region158
          $region163: #{tpu_custom_call.1} parent=155 // loop_exit
            _
        $region156: #{tpu_custom_call.1} parent=23 // pred_fallthru
          _
        // Predicated region
        $region175: #{tpu_custom_call.1} parent=23 // pred_check
          _
        $region176: #{tpu_custom_call.1} parent=23 // pred_check_branch
          %328 = sbr.rel (0) target = $region178
        $region177: #{tpu_custom_call.1} parent=23 // pred_region
          %329 = vsyncadd [#allocation2], 16
        $region178: #{tpu_custom_call.1} parent=23 // pred_fallthru
          _
        %s330 = sadd.s32 %s121, 5
        %s331 = sld [smem:[#allocation4 + %s330]]
        %p332 = scmp.gt.s32.totalorder %s331, 0
        %s333 = scalar_select %p332, %s331, 0
        %p334 = scmp.lt.s32.totalorder %s333, 63
        %s335 = scalar_select %p334, %s333, 63
        %s336 = scalar_lea.vmem [#allocation5], %s335
        %s337 = scalar_lea.vmem %s120, 5 [#allocation8]
        // Predicated region
        $region179: #{tpu_custom_call.1} parent=23 // pred_check
          _
        $region180: #{tpu_custom_call.1} parent=23 // pred_check_branch
          %339 = sbr.rel target = $region182
        $region181: #{tpu_custom_call.1} parent=23 // pred_region
          // Predicated region
          $region194: #{tpu_custom_call.1} parent=181 // pred_check
            _
          $region195: #{tpu_custom_call.1} parent=181 // pred_check_branch
            %355 = sbr.rel (0) target = $region197
          $region196: #{tpu_custom_call.1} parent=181 // pred_region
            %s357 = ssub.s32 2, 1
            loop: start=0, step=1, limit=1
            $region198: #{tpu_custom_call.1} parent=196 // loop_pre_header
              _
            $region199: #{tpu_custom_call.1} parent=196 // loop_header
              %s359 = sphi 0, %s363
              %p360 = scmp.ge.s32.totalorder %s359, 1
              %s364 = sphi %s336, %s336
              %s365 = sphi %s337, %s337
            $region200: #{tpu_custom_call.1} parent=196 // loop_header_branch
              %362 = sbr.rel (%p360) target = $region204
            $region201: #{tpu_custom_call.1} parent=196 // loop_body
              %v366 = vld [vmem:[%s364] sm:%s357]
              %367 = vst [vmem:[%s365] sm:%s357] %v366
            $region202: #{tpu_custom_call.1} parent=196 // loop_footer
              %s363 = sadd.s32 1, %s359
            $region203: #{tpu_custom_call.1} parent=196 // loop_footer_branch
              %358 = sbr.rel target = $region199
            $region204: #{tpu_custom_call.1} parent=196 // loop_exit
              _
          $region197: #{tpu_custom_call.1} parent=181 // pred_fallthru
            _
        $region182: #{tpu_custom_call.1} parent=23 // pred_fallthru
          _
        // Predicated region
        $region183: #{tpu_custom_call.1} parent=23 // pred_check
          _
        $region184: #{tpu_custom_call.1} parent=23 // pred_check_branch
          %341 = sbr.rel (0) target = $region186
        $region185: #{tpu_custom_call.1} parent=23 // pred_region
          %s343 = ssub.s32 2, 1
          loop: start=0, step=1, limit=1
          $region187: #{tpu_custom_call.1} parent=185 // loop_pre_header
            _
          $region188: #{tpu_custom_call.1} parent=185 // loop_header
            %s345 = sphi 0, %s349
            %p346 = scmp.ge.s32.totalorder %s345, 1
            %s350 = sphi %s336, %s336
            %s351 = sphi %s337, %s337
          $region189: #{tpu_custom_call.1} parent=185 // loop_header_branch
            %348 = sbr.rel (%p346) target = $region193
          $region190: #{tpu_custom_call.1} parent=185 // loop_body
            %v352 = vld [vmem:[%s350] sm:%s343]
            %353 = vst [vmem:[%s351] sm:%s343] %v352
          $region191: #{tpu_custom_call.1} parent=185 // loop_footer
            %s349 = sadd.s32 1, %s345
          $region192: #{tpu_custom_call.1} parent=185 // loop_footer_branch
            %344 = sbr.rel target = $region188
          $region193: #{tpu_custom_call.1} parent=185 // loop_exit
            _
        $region186: #{tpu_custom_call.1} parent=23 // pred_fallthru
          _
        // Predicated region
        $region205: #{tpu_custom_call.1} parent=23 // pred_check
          _
        $region206: #{tpu_custom_call.1} parent=23 // pred_check_branch
          %370 = sbr.rel (0) target = $region208
        $region207: #{tpu_custom_call.1} parent=23 // pred_region
          %371 = vsyncadd [#allocation2], 16
        $region208: #{tpu_custom_call.1} parent=23 // pred_fallthru
          _
        %s372 = sadd.s32 %s121, 6
        %s373 = sld [smem:[#allocation4 + %s372]]
        %p374 = scmp.gt.s32.totalorder %s373, 0
        %s375 = scalar_select %p374, %s373, 0
        %p376 = scmp.lt.s32.totalorder %s375, 63
        %s377 = scalar_select %p376, %s375, 63
        %s378 = scalar_lea.vmem [#allocation5], %s377
        %s379 = scalar_lea.vmem %s120, 6 [#allocation8]
        // Predicated region
        $region209: #{tpu_custom_call.1} parent=23 // pred_check
          _
        $region210: #{tpu_custom_call.1} parent=23 // pred_check_branch
          %381 = sbr.rel target = $region212
        $region211: #{tpu_custom_call.1} parent=23 // pred_region
          // Predicated region
          $region224: #{tpu_custom_call.1} parent=211 // pred_check
            _
          $region225: #{tpu_custom_call.1} parent=211 // pred_check_branch
            %397 = sbr.rel (0) target = $region227
          $region226: #{tpu_custom_call.1} parent=211 // pred_region
            %s399 = ssub.s32 2, 1
            loop: start=0, step=1, limit=1
            $region228: #{tpu_custom_call.1} parent=226 // loop_pre_header
              _
            $region229: #{tpu_custom_call.1} parent=226 // loop_header
              %s401 = sphi 0, %s405
              %p402 = scmp.ge.s32.totalorder %s401, 1
              %s406 = sphi %s378, %s378
              %s407 = sphi %s379, %s379
            $region230: #{tpu_custom_call.1} parent=226 // loop_header_branch
              %404 = sbr.rel (%p402) target = $region234
            $region231: #{tpu_custom_call.1} parent=226 // loop_body
              %v408 = vld [vmem:[%s406] sm:%s399]
              %409 = vst [vmem:[%s407] sm:%s399] %v408
            $region232: #{tpu_custom_call.1} parent=226 // loop_footer
              %s405 = sadd.s32 1, %s401
            $region233: #{tpu_custom_call.1} parent=226 // loop_footer_branch
              %400 = sbr.rel target = $region229
            $region234: #{tpu_custom_call.1} parent=226 // loop_exit
              _
          $region227: #{tpu_custom_call.1} parent=211 // pred_fallthru
            _
        $region212: #{tpu_custom_call.1} parent=23 // pred_fallthru
          _
        // Predicated region
        $region213: #{tpu_custom_call.1} parent=23 // pred_check
          _
        $region214: #{tpu_custom_call.1} parent=23 // pred_check_branch
          %383 = sbr.rel (0) target = $region216
        $region215: #{tpu_custom_call.1} parent=23 // pred_region
          %s385 = ssub.s32 2, 1
          loop: start=0, step=1, limit=1
          $region217: #{tpu_custom_call.1} parent=215 // loop_pre_header
            _
          $region218: #{tpu_custom_call.1} parent=215 // loop_header
            %s387 = sphi 0, %s391
            %p388 = scmp.ge.s32.totalorder %s387, 1
            %s392 = sphi %s378, %s378
            %s393 = sphi %s379, %s379
          $region219: #{tpu_custom_call.1} parent=215 // loop_header_branch
            %390 = sbr.rel (%p388) target = $region223
          $region220: #{tpu_custom_call.1} parent=215 // loop_body
            %v394 = vld [vmem:[%s392] sm:%s385]
            %395 = vst [vmem:[%s393] sm:%s385] %v394
          $region221: #{tpu_custom_call.1} parent=215 // loop_footer
            %s391 = sadd.s32 1, %s387
          $region222: #{tpu_custom_call.1} parent=215 // loop_footer_branch
            %386 = sbr.rel target = $region218
          $region223: #{tpu_custom_call.1} parent=215 // loop_exit
            _
        $region216: #{tpu_custom_call.1} parent=23 // pred_fallthru
          _
        // Predicated region
        $region235: #{tpu_custom_call.1} parent=23 // pred_check
          _
        $region236: #{tpu_custom_call.1} parent=23 // pred_check_branch
          %412 = sbr.rel (0) target = $region238
        $region237: #{tpu_custom_call.1} parent=23 // pred_region
          %413 = vsyncadd [#allocation2], 16
        $region238: #{tpu_custom_call.1} parent=23 // pred_fallthru
          _
        %s414 = sadd.s32 %s121, 7
        %s415 = sld [smem:[#allocation4 + %s414]]
        %p416 = scmp.gt.s32.totalorder %s415, 0
        %s417 = scalar_select %p416, %s415, 0
        %p418 = scmp.lt.s32.totalorder %s417, 63
        %s419 = scalar_select %p418, %s417, 63
        %s420 = scalar_lea.vmem [#allocation5], %s419
        %s421 = scalar_lea.vmem %s120, 7 [#allocation8]
        // Predicated region
        $region239: #{tpu_custom_call.1} parent=23 // pred_check
          _
        $region240: #{tpu_custom_call.1} parent=23 // pred_check_branch
          %423 = sbr.rel target = $region242
        $region241: #{tpu_custom_call.1} parent=23 // pred_region
          // Predicated region
          $region254: #{tpu_custom_call.1} parent=241 // pred_check
            _
          $region255: #{tpu_custom_call.1} parent=241 // pred_check_branch
            %439 = sbr.rel (0) target = $region257
          $region256: #{tpu_custom_call.1} parent=241 // pred_region
            %s441 = ssub.s32 2, 1
            loop: start=0, step=1, limit=1
            $region258: #{tpu_custom_call.1} parent=256 // loop_pre_header
              _
            $region259: #{tpu_custom_call.1} parent=256 // loop_header
              %s443 = sphi 0, %s447
              %p444 = scmp.ge.s32.totalorder %s443, 1
              %s448 = sphi %s420, %s420
              %s449 = sphi %s421, %s421
            $region260: #{tpu_custom_call.1} parent=256 // loop_header_branch
              %446 = sbr.rel (%p444) target = $region264
            $region261: #{tpu_custom_call.1} parent=256 // loop_body
              %v450 = vld [vmem:[%s448] sm:%s441]
              %451 = vst [vmem:[%s449] sm:%s441] %v450
            $region262: #{tpu_custom_call.1} parent=256 // loop_footer
              %s447 = sadd.s32 1, %s443
            $region263: #{tpu_custom_call.1} parent=256 // loop_footer_branch
              %442 = sbr.rel target = $region259
            $region264: #{tpu_custom_call.1} parent=256 // loop_exit
              _
          $region257: #{tpu_custom_call.1} parent=241 // pred_fallthru
            _
        $region242: #{tpu_custom_call.1} parent=23 // pred_fallthru
          _
        // Predicated region
        $region243: #{tpu_custom_call.1} parent=23 // pred_check
          _
        $region244: #{tpu_custom_call.1} parent=23 // pred_check_branch
          %425 = sbr.rel (0) target = $region246
        $region245: #{tpu_custom_call.1} parent=23 // pred_region
          %s427 = ssub.s32 2, 1
          loop: start=0, step=1, limit=1
          $region247: #{tpu_custom_call.1} parent=245 // loop_pre_header
            _
          $region248: #{tpu_custom_call.1} parent=245 // loop_header
            %s429 = sphi 0, %s433
            %p430 = scmp.ge.s32.totalorder %s429, 1
            %s434 = sphi %s420, %s420
            %s435 = sphi %s421, %s421
          $region249: #{tpu_custom_call.1} parent=245 // loop_header_branch
            %432 = sbr.rel (%p430) target = $region253
          $region250: #{tpu_custom_call.1} parent=245 // loop_body
            %v436 = vld [vmem:[%s434] sm:%s427]
            %437 = vst [vmem:[%s435] sm:%s427] %v436
          $region251: #{tpu_custom_call.1} parent=245 // loop_footer
            %s433 = sadd.s32 1, %s429
          $region252: #{tpu_custom_call.1} parent=245 // loop_footer_branch
            %428 = sbr.rel target = $region248
          $region253: #{tpu_custom_call.1} parent=245 // loop_exit
            _
        $region246: #{tpu_custom_call.1} parent=23 // pred_fallthru
          _
        // Predicated region
        $region265: #{tpu_custom_call.1} parent=23 // pred_check
          _
        $region266: #{tpu_custom_call.1} parent=23 // pred_check_branch
          %454 = sbr.rel (0) target = $region268
        $region267: #{tpu_custom_call.1} parent=23 // pred_region
          %455 = vsyncadd [#allocation2], 16
        $region268: #{tpu_custom_call.1} parent=23 // pred_fallthru
          _
        %s456 = smul.u32 8, 1
        %s457 = sshll.u32 %s456, 4
        %458 = dma.done [#allocation2], %s457
        %s459 = sand.u32 %s54, 1
        %s460 = scalar_lea.sflag [#allocation7], %s459
        %s461 = sand.u32 %s54, 1
        %s462 = smul.addr %s461, 8
        %s463 = scalar_lea.vmem [#allocation8], %s462
        // Predicated region
        $region269: #{tpu_custom_call.1} parent=23 // pred_check
          %p464 = pneg %p64
        $region270: #{tpu_custom_call.1} parent=23 // pred_check_branch
          %466 = sbr.rel (%p464) target = $region272
        $region271: #{tpu_custom_call.1} parent=23 // pred_region
          %468 = vsyncadd %s460, 0
          %s469 = smul.addr %s25, 8
          %s470 = scalar_lea.hbm %s2, %s469
          %s472 = sshll.u32 %s463, 4
          %s473 = int_to_ptr.vmem [resolvable:$true] %s472
          %s474 = sshll.u32 %s470, 4
          %s475 = int_to_ptr.hbm [resolvable:$true] %s474
          %477 = dma.vmem_to_hbm [thread:$0]  %s473, 128, %s475, %s460
        $region272: #{tpu_custom_call.1} parent=23 // pred_fallthru
          _
      $region24: #{tpu_custom_call.1} parent=5 // pred_fallthru
        _
      %p478 = scmp.le.s32.totalorder 2, %s20
      // Predicated region
      $region273: #{tpu_custom_call.1} parent=5 // pred_check
        %p479 = pneg %p478
      $region274: #{tpu_custom_call.1} parent=5 // pred_check_branch
        %481 = sbr.rel (%p479) target = $region276
      $region275: #{tpu_custom_call.1} parent=5 // pred_region
        %s482 = ssub.s32 %s20, 2
        // Predicated region
        $region277: #{tpu_custom_call.1} parent=275 // pred_check
          %p483 = pneg %p70
        $region278: #{tpu_custom_call.1} parent=275 // pred_check_branch
          %485 = sbr.rel (%p483) target = $region280
        $region279: #{tpu_custom_call.1} parent=275 // pred_region
          %s486 = sand.u32 %s55, 1
          %s487 = scalar_lea.sflag [#allocation7], %s486
          %s488 = sand.u32 %s55, 1
          %s489 = smul.addr %s488, 8
          %s490 = scalar_lea.vmem [#allocation8], %s489
          %492 = dma.done %s487, 128
        $region280: #{tpu_custom_call.1} parent=275 // pred_fallthru
          _
      $region276: #{tpu_custom_call.1} parent=5 // pred_fallthru
        _
    $region6: #{tpu_custom_call.1} parent=1 // loop_footer
      %s24 = sadd.s32 1, %s20
    $region7: #{tpu_custom_call.1} parent=1 // loop_footer_branch
      %19 = sbr.rel target = $region3
    $region8: #{tpu_custom_call.1} parent=1 // loop_exit
      _
    %493 = vsyncpa [#allocation6], 1
    %s494 = scalar_lea.sflag [#allocation6], 1
    %495 = vsyncpa %s494, 1
    %496 = vsyncpa [#allocation7], 1
    %s497 = scalar_lea.sflag [#allocation7], 1
    %498 = vsyncpa %s497, 1
  %499 = vsyncmov [#allocation2]
  %s500 = vpop.sfrf %499
  %p501 = scmp.eq.s32.totalorder %s500, 0
  %p502 = pneg %p501
  %504 = shalt.err (%p502)

</llo_original>
